<compile_context>
chip_gen: v6e
topology: v6e:2x2x1
jax: 0.10.0
libtpu: 0.0.40
codegen_flags: <defaults>
</compile_context>

<pallas_src>
import jax
import jax.numpy as jnp
from jax import lax
from jax.experimental import pallas as pl
from jax.experimental.pallas import tpu as pltpu


def _mlp_kernel(x_ref, w1_ref, b1_ref, w2_ref, b2_ref, out_ref):
    """One batch tile of: relu(x @ W1 + b1) @ W2 + b2, output lane-dense.

    x_ref : (TB, D)  compute dtype (bf16 by default)
    w1_ref: (D, H)   compute dtype, VMEM-resident across the grid
    b1_ref: (1, H)   f32, resident
    w2_ref: (1, H)   f32, resident (second Linear's weight as a row vector)
    b2_ref: (1, 1)   f32, resident
    out_ref: (1, TB) f32 — batch on the lane axis (lane-dense, unmasked stores)
    """
    # Dominant matmul on the MXU, f32 accumulation.
    h = jnp.dot(x_ref[...], w1_ref[...], preferred_element_type=jnp.float32)
    h = jnp.maximum(h + b1_ref[...], 0.0)                       # (TB, H) f32, bias+ReLU

    # H -> 1 projection as a tiny (1,H) x (TB,H)^T MXU contraction producing the
    # lane-dense (1, TB) row directly (no VPU mul + XLU reduce + relayout).
    y = lax.dot_general(
        w2_ref[...], h,
        dimension_numbers=(((1,), (1,)), ((), ())),
        preferred_element_type=jnp.float32)                     # (1, TB)
    out_ref[...] = (y + b2_ref[...]).astype(out_ref.dtype)


def _vmem_capacity_bytes(default=64 * 1024 * 1024):
    """Per-core VMEM capacity; conservative 64 MiB (v7x) fallback."""
    try:
        info = pltpu.get_tpu_info()
        cap = getattr(info, "vmem_capacity_bytes", None)
        return int(cap) if cap else default
    except Exception:
        return default


def _single_buffer_mode():
    """pl.Buffered(1) if available (single-buffered resident weights)."""
    buffered = getattr(pl, "Buffered", None)
    if buffered is None:
        return None
    try:
        return buffered(1)
    except Exception:
        return None


def _const_index_map(ndims):
    return lambda i: (0,) * ndims


def _resident_spec(shape, mode):
    """BlockSpec for a grid-invariant (VMEM-resident) parameter block."""
    index_map = _const_index_map(len(shape))
    if mode is None:
        return pl.BlockSpec(shape, index_map)
    try:
        return pl.BlockSpec(shape, index_map, pipeline_mode=mode)
    except TypeError:
        # Older BlockSpec without pipeline_mode: default double buffering.
        return pl.BlockSpec(shape, index_map)


def init_params(input_size: int, hidden: int = 512, out: int = 1, seed: int = 0):
    """Deterministic synthetic parameters (weight_norm at init == raw weight)."""
    k1, k2, k3, k4 = jax.random.split(jax.random.PRNGKey(seed), 4)
    w1 = jax.random.normal(k1, (input_size, hidden), jnp.float32) * 0.05
    b1 = jax.random.normal(k2, (1, hidden), jnp.float32) * 0.05
    w2 = jax.random.normal(k3, (hidden, out), jnp.float32) * 0.05
    b2 = jax.random.normal(k4, (1, out), jnp.float32) * 0.05
    return w1, b1, w2, b2


def value_prediction_head(pooled_output, params, targets=None, *,
                          block_b: int = 1024,
                          compute_dtype=jnp.bfloat16):
    """Pallas implementation of ValuePredictionHead.forward.

    Returns (value_pred,) or (loss, value_pred) if targets is given,
    matching the PyTorch module's tuple convention.
    """
    w1, b1, w2, b2 = params
    B, D = pooled_output.shape
    H = w1.shape[1]
    out_dtype = pooled_output.dtype
    csize = jnp.dtype(compute_dtype).itemsize

    # ---- Tile-size / VMEM budgeting (generation-aware) ---------------------
    vmem_cap = _vmem_capacity_bytes()
    vmem_budget = int(vmem_cap * 0.70)

    def _footprint(tb):
        x_bytes = 2 * tb * D * csize               # double-buffered x stream
        w_bytes = D * H * csize + 2 * H * 4 + 4    # single-buffered resident params
        h_bytes = 2 * tb * H * 4                   # (TB,H) f32 intermediate + headroom
        o_bytes = 2 * tb * 4                       # double-buffered f32 output row
        return x_bytes + w_bytes + h_bytes + o_bytes

    b_pad128 = max(128, ((B + 127) // 128) * 128)
    TB = max(128, (min(block_b, b_pad128) // 128) * 128)
    while TB > 128 and _footprint(TB) > vmem_budget:
        TB -= 128
    # Prefer >= 2 grid steps when the batch spans more than one 128-row tile so
    # the "parallel" batch axis can split across v7x's 2 TensorCores.
    if b_pad128 >= 2 * 128 and pl.cdiv(b_pad128, TB) < 2:
        TB = max(128, ((b_pad128 // 2 + 127) // 128) * 128)

    n_tiles = pl.cdiv(B, TB)
    B_pad = n_tiles * TB
    vmem_limit = int(min(vmem_cap, max(_footprint(TB) + (8 << 20), 32 << 20)))

    # ---- Pre-cast / reshape params once (layout plumbing, not compute) -----
    x = pooled_output.astype(compute_dtype)
    if B_pad != B:
        x = jnp.pad(x, ((0, B_pad - B), (0, 0)))
    w1c = w1.astype(compute_dtype)                     # (D, H) bf16
    b1r = b1.reshape(1, H).astype(jnp.float32)         # (1, H)
    w2r = w2.reshape(1, H).astype(jnp.float32)         # (H, 1) -> (1, H)
    b2r = b2.reshape(1, 1).astype(jnp.float32)         # (1, 1)

    flops = 2 * B_pad * D * H + 2 * B_pad * H + 2 * B_pad * H
    bytes_accessed = (B_pad * D * csize + D * H * csize
                      + H * 4 + H * 4 + 4
                      + B_pad * H * 4            # (TB,H) intermediate traffic
                      + B_pad * 4)               # f32 output row

    def _call(resident_mode):
        in_specs = [
            pl.BlockSpec((TB, D), lambda i: (i, 0)),          # x: streamed per tile
            _resident_spec((D, H), resident_mode),            # W1: resident
            _resident_spec((1, H), resident_mode),            # b1: resident
            _resident_spec((1, H), resident_mode),            # W2 row: resident
            _resident_spec((1, 1), resident_mode),            # b2: resident
        ]
        return pl.pallas_call(
            _mlp_kernel,
            out_shape=jax.ShapeDtypeStruct((1, B_pad), jnp.float32),
            grid=(n_tiles,),
            in_specs=in_specs,
            out_specs=pl.BlockSpec((1, TB), lambda i: (0, i)),  # lane-dense output
            compiler_params=pltpu.CompilerParams(
                dimension_semantics=("parallel",),
                vmem_limit_bytes=vmem_limit,
            ),
            cost_estimate=pl.CostEstimate(
                flops=flops, transcendentals=0, bytes_accessed=bytes_accessed),
        )(x, w1c, b1r, w2r, b2r)

    mode = _single_buffer_mode()
    if mode is None:
        y_row = _call(None)
    else:
        try:
            y_row = _call(mode)
        except Exception:
            # Lowering without single-buffer support: fall back to the default
            # (double-buffered resident weights; correct, slightly more VMEM).
            y_row = _call(None)

    # Back to the PyTorch (B, 1) column layout in f32; drop padded rows.
    value_pred_f32 = y_row[0, :B].reshape(B, 1)
    value_pred = value_pred_f32.astype(out_dtype)

    outputs = (value_pred,)
    if targets is not None:
        # MSELoss (mean reduction) on the tiny (B, 1) f32 prediction — negligible
        # XLA work, and correct regardless of how the batch was tiled/padded.
        diff = value_pred_f32 - targets.astype(jnp.float32)
        loss = jnp.mean(diff * diff)
        outputs = (loss,) + outputs
    return outputs


if __name__ == "__main__":
    BATCH, INPUT_SIZE, HIDDEN = 2, 32, 512

    key = jax.random.PRNGKey(0)
    kx, kt, kx2 = jax.random.split(key, 3)
    pooled_output = jax.random.normal(kx, (BATCH, INPUT_SIZE), jnp.float32)
    targets = jax.random.normal(kt, (BATCH, 1), jnp.float32)

    params = init_params(INPUT_SIZE, HIDDEN, 1, seed=0)
    w1, b1, w2, b2 = params

    # Inference path: outputs = (value_pred,)
    (value_pred,) = value_prediction_head(pooled_output, params)
    value_pred = jax.block_until_ready(value_pred)

    # Training path: outputs = (loss, value_pred)
    loss, value_pred2 = value_prediction_head(pooled_output, params, targets)
    loss, value_pred2 = jax.block_until_ready((loss, value_pred2))

    # Plain-JAX reference with matching bf16 input precision (f32 accumulate).
    xq = pooled_output.astype(jnp.bfloat16).astype(jnp.float32)
    w1q = w1.astype(jnp.bfloat16).astype(jnp.float32)
    ref_pred = jnp.maximum(xq @ w1q + b1, 0.0) @ w2 + b2
    ref_loss = jnp.mean((ref_pred - targets) ** 2)

    assert value_pred.shape == (BATCH, 1)
    assert jnp.allclose(value_pred, ref_pred, atol=1e-3, rtol=1e-3)
    assert jnp.allclose(value_pred2, ref_pred, atol=1e-3, rtol=1e-3)
    assert jnp.allclose(loss, ref_loss, atol=1e-3, rtol=1e-3)

    # Exercise the multi-tile + padding path: B=300, TB=128 -> grid=(3,), pad to 384.
    B2 = 300
    x2 = jax.random.normal(kx2, (B2, INPUT_SIZE), jnp.float32)
    (vp2,) = value_prediction_head(x2, params, block_b=128)
    vp2 = jax.block_until_ready(vp2)
    x2q = x2.astype(jnp.bfloat16).astype(jnp.float32)
    ref2 = jnp.maximum(x2q @ w1q + b1, 0.0) @ w2 + b2
    assert vp2.shape == (B2, 1)
    assert jnp.allclose(vp2, ref2, atol=1e-3, rtol=1e-3)

    # Also exercise the default (auto) tile selection on a multi-tile batch.
    (vp3,) = value_prediction_head(x2, params)
    vp3 = jax.block_until_ready(vp3)
    assert jnp.allclose(vp3, ref2, atol=1e-3, rtol=1e-3)

    print("KERNEL_OK")
</pallas_src>

<mosaic_0001>
module attributes {stable_mosaic.version = 11 : i64} {
  func.func @_mlp_kernel(%arg0: i32, %arg1: memref<128x32xbf16, #tpu.memory_space<vmem>>, %arg2: memref<32x512xbf16, #tpu.memory_space<vmem>>, %arg3: memref<1x512xf32, #tpu.memory_space<vmem>>, %arg4: memref<1x512xf32, #tpu.memory_space<vmem>>, %arg5: memref<1x1xf32, #tpu.memory_space<vmem>>, %arg6: memref<1x128xf32, #tpu.memory_space<vmem>>) attributes {dimension_semantics = [#tpu.dimension_semantics<parallel>], iteration_bounds = array<i64: 1>, scalar_prefetch = 0 : i64, scratch_operands = 0 : i64, tpu.core_type = #tpu.core_type<tc>, window_params = [{transform_indices = @transform_0, window_bounds = array<i64: 128, 32>}, {pipeline_mode = #tpu.pipeline_mode<synchronous>, transform_indices = @transform_1, window_bounds = array<i64: 32, 512>}, {pipeline_mode = #tpu.pipeline_mode<synchronous>, transform_indices = @transform_2, window_bounds = array<i64: 1, 512>}, {pipeline_mode = #tpu.pipeline_mode<synchronous>, transform_indices = @transform_3, window_bounds = array<i64: 1, 512>}, {pipeline_mode = #tpu.pipeline_mode<synchronous>, transform_indices = @transform_4, window_bounds = array<i64: 1, 1>}, {transform_indices = @transform_5, window_bounds = array<i64: 1, 128>}]} {
    %c0 = arith.constant 0 : index
    %c0_0 = arith.constant 0 : index
    %0 = vector.load %arg1[%c0, %c0_0] : memref<128x32xbf16, #tpu.memory_space<vmem>>, vector<128x32xbf16>
    %c0_1 = arith.constant 0 : index
    %c0_2 = arith.constant 0 : index
    %1 = vector.load %arg2[%c0_1, %c0_2] : memref<32x512xbf16, #tpu.memory_space<vmem>>, vector<32x512xbf16>
    %cst = arith.constant dense<0.000000e+00> : vector<128x512xf32>
    %2 = tpu.matmul %0, %1, %cst {dimension_numbers = #tpu.dot_dimension_numbers<[1], [0], [0], [1], [0, 0, 1, 1], [], []>} : vector<128x32xbf16>, vector<32x512xbf16>, vector<128x512xf32> -> vector<128x512xf32>
    %c0_3 = arith.constant 0 : index
    %c0_4 = arith.constant 0 : index
    %3 = vector.load %arg3[%c0_3, %c0_4] : memref<1x512xf32, #tpu.memory_space<vmem>>, vector<1x512xf32>
    %4 = vector.broadcast %3 : vector<1x512xf32> to vector<128x512xf32>
    %5 = arith.addf %2, %4 : vector<128x512xf32>
    %cst_5 = arith.constant 0.000000e+00 : f32
    %6 = vector.broadcast %cst_5 : f32 to vector<128x512xf32>
    %7 = arith.maximumf %5, %6 : vector<128x512xf32>
    %c0_6 = arith.constant 0 : index
    %c0_7 = arith.constant 0 : index
    %8 = vector.load %arg4[%c0_6, %c0_7] : memref<1x512xf32, #tpu.memory_space<vmem>>, vector<1x512xf32>
    %cst_8 = arith.constant dense<0.000000e+00> : vector<1x128xf32>
    %9 = tpu.matmul %8, %7, %cst_8 {dimension_numbers = #tpu.dot_dimension_numbers<[1], [1], [0], [0], [0, 0, 1, 0], [], []>} : vector<1x512xf32>, vector<128x512xf32>, vector<1x128xf32> -> vector<1x128xf32>
    %c0_9 = arith.constant 0 : index
    %c0_10 = arith.constant 0 : index
    %10 = vector.load %arg5[%c0_9, %c0_10] : memref<1x1xf32, #tpu.memory_space<vmem>>, vector<1x1xf32>
    %11 = vector.broadcast %10 : vector<1x1xf32> to vector<1x128xf32>
    %12 = arith.addf %9, %11 : vector<1x128xf32>
    %c0_11 = arith.constant 0 : index
    %c0_12 = arith.constant 0 : index
    %13 = vector.load %arg6[%c0_11, %c0_12] : memref<1x128xf32, #tpu.memory_space<vmem>>, vector<1x128xf32>
    tpu.vector_store %arg6[%c0_11, %c0_12], %12 {strides = array<i32>} : memref<1x128xf32, #tpu.memory_space<vmem>>, vector<1x128xf32>,
    return
  }
  func.func @transform_0(%arg0: i32) -> (i32, i32) {
    %c0_i32 = arith.constant 0 : i32
    %c0_i32_0 = arith.constant 0 : i32
    return %arg0, %c0_i32 : i32, i32
  }
  func.func @transform_1(%arg0: i32) -> (i32, i32) {
    %c0_i32 = arith.constant 0 : i32
    %c0_i32_0 = arith.constant 0 : i32
    %c0_i32_1 = arith.constant 0 : i32
    return %c0_i32, %c0_i32_0 : i32, i32
  }
  func.func @transform_2(%arg0: i32) -> (i32, i32) {
    %c0_i32 = arith.constant 0 : i32
    %c0_i32_0 = arith.constant 0 : i32
    %c0_i32_1 = arith.constant 0 : i32
    return %c0_i32, %c0_i32_0 : i32, i32
  }
  func.func @transform_3(%arg0: i32) -> (i32, i32) {
    %c0_i32 = arith.constant 0 : i32
    %c0_i32_0 = arith.constant 0 : i32
    %c0_i32_1 = arith.constant 0 : i32
    return %c0_i32, %c0_i32_0 : i32, i32
  }
  func.func @transform_4(%arg0: i32) -> (i32, i32) {
    %c0_i32 = arith.constant 0 : i32
    %c0_i32_0 = arith.constant 0 : i32
    %c0_i32_1 = arith.constant 0 : i32
    return %c0_i32, %c0_i32_0 : i32, i32
  }
  func.func @transform_5(%arg0: i32) -> (i32, i32) {
    %c0_i32 = arith.constant 0 : i32
    %c0_i32_0 = arith.constant 0 : i32
    return %c0_i32, %arg0 : i32, i32
  }
}

module attributes {stable_mosaic.version = 11 : i64} {
  func.func @_mlp_kernel(%arg0: i32, %arg1: memref<128x32xbf16, #tpu.memory_space<vmem>>, %arg2: memref<32x512xbf16, #tpu.memory_space<vmem>>, %arg3: memref<1x512xf32, #tpu.memory_space<vmem>>, %arg4: memref<1x512xf32, #tpu.memory_space<vmem>>, %arg5: memref<1x1xf32, #tpu.memory_space<vmem>>, %arg6: memref<1x128xf32, #tpu.memory_space<vmem>>) attributes {dimension_semantics = [#tpu.dimension_semantics<parallel>], iteration_bounds = array<i64: 1>, scalar_prefetch = 0 : i64, scratch_operands = 0 : i64, tpu.core_type = #tpu.core_type<tc>, window_params = [{transform_indices = @transform_0, window_bounds = array<i64: 128, 32>}, {pipeline_mode = #tpu.pipeline_mode<synchronous>, transform_indices = @transform_1, window_bounds = array<i64: 32, 512>}, {pipeline_mode = #tpu.pipeline_mode<synchronous>, transform_indices = @transform_2, window_bounds = array<i64: 1, 512>}, {pipeline_mode = #tpu.pipeline_mode<synchronous>, transform_indices = @transform_3, window_bounds = array<i64: 1, 512>}, {pipeline_mode = #tpu.pipeline_mode<synchronous>, transform_indices = @transform_4, window_bounds = array<i64: 1, 1>}, {transform_indices = @transform_5, window_bounds = array<i64: 1, 128>}]} {
    %c0 = arith.constant 0 : index
    %c0_0 = arith.constant 0 : index
    %0 = vector.load %arg1[%c0, %c0_0] : memref<128x32xbf16, #tpu.memory_space<vmem>>, vector<128x32xbf16>
    %c0_1 = arith.constant 0 : index
    %c0_2 = arith.constant 0 : index
    %1 = vector.load %arg2[%c0_1, %c0_2] : memref<32x512xbf16, #tpu.memory_space<vmem>>, vector<32x512xbf16>
    %cst = arith.constant dense<0.000000e+00> : vector<128x512xf32>
    %2 = tpu.matmul %0, %1, %cst {dimension_numbers = #tpu.dot_dimension_numbers<[1], [0], [0], [1], [0, 0, 1, 1], [], []>} : vector<128x32xbf16>, vector<32x512xbf16>, vector<128x512xf32> -> vector<128x512xf32>
    %c0_3 = arith.constant 0 : index
    %c0_4 = arith.constant 0 : index
    %3 = vector.load %arg3[%c0_3, %c0_4] : memref<1x512xf32, #tpu.memory_space<vmem>>, vector<1x512xf32>
    %4 = vector.broadcast %3 : vector<1x512xf32> to vector<128x512xf32>
    %5 = arith.addf %2, %4 : vector<128x512xf32>
    %cst_5 = arith.constant 0.000000e+00 : f32
    %6 = vector.broadcast %cst_5 : f32 to vector<128x512xf32>
    %7 = arith.maximumf %5, %6 : vector<128x512xf32>
    %c0_6 = arith.constant 0 : index
    %c0_7 = arith.constant 0 : index
    %8 = vector.load %arg4[%c0_6, %c0_7] : memref<1x512xf32, #tpu.memory_space<vmem>>, vector<1x512xf32>
    %cst_8 = arith.constant dense<0.000000e+00> : vector<1x128xf32>
    %9 = tpu.matmul %8, %7, %cst_8 {dimension_numbers = #tpu.dot_dimension_numbers<[1], [1], [0], [0], [0, 0, 1, 0], [], []>} : vector<1x512xf32>, vector<128x512xf32>, vector<1x128xf32> -> vector<1x128xf32>
    %c0_9 = arith.constant 0 : index
    %c0_10 = arith.constant 0 : index
    %10 = vector.load %arg5[%c0_9, %c0_10] : memref<1x1xf32, #tpu.memory_space<vmem>>, vector<1x1xf32>
    %11 = vector.broadcast %10 : vector<1x1xf32> to vector<1x128xf32>
    %12 = arith.addf %9, %11 : vector<1x128xf32>
    %c0_11 = arith.constant 0 : index
    %c0_12 = arith.constant 0 : index
    %13 = vector.load %arg6[%c0_11, %c0_12] : memref<1x128xf32, #tpu.memory_space<vmem>>, vector<1x128xf32>
    tpu.vector_store %arg6[%c0_11, %c0_12], %12 {strides = array<i32>} : memref<1x128xf32, #tpu.memory_space<vmem>>, vector<1x128xf32>,
    return
  }
  func.func @transform_0(%arg0: i32) -> (i32, i32) {
    %c0_i32 = arith.constant 0 : i32
    %c0_i32_0 = arith.constant 0 : i32
    return %arg0, %c0_i32 : i32, i32
  }
  func.func @transform_1(%arg0: i32) -> (i32, i32) {
    %c0_i32 = arith.constant 0 : i32
    %c0_i32_0 = arith.constant 0 : i32
    %c0_i32_1 = arith.constant 0 : i32
    return %c0_i32, %c0_i32_0 : i32, i32
  }
  func.func @transform_2(%arg0: i32) -> (i32, i32) {
    %c0_i32 = arith.constant 0 : i32
    %c0_i32_0 = arith.constant 0 : i32
    %c0_i32_1 = arith.constant 0 : i32
    return %c0_i32, %c0_i32_0 : i32, i32
  }
  func.func @transform_3(%arg0: i32) -> (i32, i32) {
    %c0_i32 = arith.constant 0 : i32
    %c0_i32_0 = arith.constant 0 : i32
    %c0_i32_1 = arith.constant 0 : i32
    return %c0_i32, %c0_i32_0 : i32, i32
  }
  func.func @transform_4(%arg0: i32) -> (i32, i32) {
    %c0_i32 = arith.constant 0 : i32
    %c0_i32_0 = arith.constant 0 : i32
    %c0_i32_1 = arith.constant 0 : i32
    return %c0_i32, %c0_i32_0 : i32, i32
  }
  func.func @transform_5(%arg0: i32) -> (i32, i32) {
    %c0_i32 = arith.constant 0 : i32
    %c0_i32_0 = arith.constant 0 : i32
    return %c0_i32, %arg0 : i32, i32
  }
}

</mosaic_0001>

<llo_original>
// kernel: tpu_custom_call.1
$region0: #{tpu_custom_call.1}
  #allocation0 [shape = 'u32[]', space=smem, size = 0x4, offset = 0x4, fixed_abs, tag = 'smem constant byte address 0x4 - core index']
  #allocation1 [shape = 'u32[144,128]{1,0:T(1,128)}', space=vmem, size = 0x12000, scoped, tag = 'internal scratch']
  #allocation2 [shape = 'f32[1,1]{1,0:T(1,128)S(1)}', space=vmem, size = 0x200, scoped, tag = 'scoped memory for tpu_custom_call.1']
  %s0 = inlined_call_operand.vmem [shape: bf16[128,32], index: 0, kind: input, shape index: {}]
  %s1 = inlined_call_operand.vmem [shape: bf16[32,512], index: 1, kind: input, shape index: {}]
  %s2 = inlined_call_operand.vmem [shape: f32[1,512], index: 2, kind: input, shape index: {}]
  %s3 = inlined_call_operand.vmem [shape: f32[1,512], index: 3, kind: input, shape index: {}]
  %s4 = inlined_call_operand.<no memory space> [shape: f32[1,1], index: 4, kind: input, shape index: {}]
  %s5 = inlined_call_operand.hbm [shape: f32[1,128], index: 5, kind: output, shape index: {}]
  %s6 = sld [smem:[#allocation0]]
  $region30: #{tpu_custom_call.1} parent=0
    _
  %s8 = ssub.s32 1, %s6
  %s9 = scalar_select 0, %s8, %s6
  %v10 = vstv %s4
  %11 = vst [vmem:[#allocation2] sm:$0x1] %v10
  $region1: #{tpu_custom_call.1} parent=0
    #allocation3 [shape = 'u8[512]{0}', space=vmem, size = 0x400, scoped, tag = 'output window, operand 0, single buffered']
    #allocation4 [shape = 's32[1]{0}', space=sflag, size = 0x4, scoped, tag = 'scoped memory for tpu_custom_call.1']
    %12 = vsyncpa [#allocation4], 0
    // Predicated region
    $region2: #{tpu_custom_call.1} parent=1 // pred_check
      _
    $region3: #{tpu_custom_call.1} parent=1 // pred_check_branch
      %14 = sbr.rel (0) target = $region5
    $region4: #{tpu_custom_call.1} parent=1 // pred_region
      _
    $region5: #{tpu_custom_call.1} parent=1 // pred_fallthru
      _
    // Predicated region
    $region6: #{tpu_custom_call.1} parent=1 // pred_check
      _
    $region7: #{tpu_custom_call.1} parent=1 // pred_check_branch
      %16 = sbr.rel (0) target = $region9
    $region8: #{tpu_custom_call.1} parent=1 // pred_region
      _
    $region9: #{tpu_custom_call.1} parent=1 // pred_fallthru
      _
    // Predicated region
    $region10: #{tpu_custom_call.1} parent=1 // pred_check
      _
    $region11: #{tpu_custom_call.1} parent=1 // pred_check_branch
      %18 = sbr.rel (0) target = $region13
    $region12: #{tpu_custom_call.1} parent=1 // pred_region
      _
    $region13: #{tpu_custom_call.1} parent=1 // pred_fallthru
      _
    // Predicated region
    $region14: #{tpu_custom_call.1} parent=1 // pred_check
      _
    $region15: #{tpu_custom_call.1} parent=1 // pred_check_branch
      %20 = sbr.rel (0) target = $region17
    $region16: #{tpu_custom_call.1} parent=1 // pred_region
      _
    $region17: #{tpu_custom_call.1} parent=1 // pred_fallthru
      _
    // Predicated region
    $region18: #{tpu_custom_call.1} parent=1 // pred_check
      _
    $region19: #{tpu_custom_call.1} parent=1 // pred_check_branch
      %22 = sbr.rel (0) target = $region21
    $region20: #{tpu_custom_call.1} parent=1 // pred_region
      _
    $region21: #{tpu_custom_call.1} parent=1 // pred_fallthru
      _
    %v24 = vld [vmem:[%s0] sm:$0xf]
    %v25 = vld [vmem:[%s0 + $0x4] sm:$0xf]
    %v26 = vld [vmem:[%s0 + $0x8] sm:$0xf]
    %v27 = vld [vmem:[%s0 + $0xc] sm:$0xf]
    %v28 = vld [vmem:[%s0 + $0x10] sm:$0xf]
    %v29 = vld [vmem:[%s0 + $0x14] sm:$0xf]
    %v30 = vld [vmem:[%s0 + $0x18] sm:$0xf]
    %v31 = vld [vmem:[%s0 + $0x1c] sm:$0xf]
    %v32 = vld [vmem:[%s0 + $0x20] sm:$0xf]
    %v33 = vld [vmem:[%s0 + $0x24] sm:$0xf]
    %v34 = vld [vmem:[%s0 + $0x28] sm:$0xf]
    %v35 = vld [vmem:[%s0 + $0x2c] sm:$0xf]
    %v36 = vld [vmem:[%s0 + $0x30] sm:$0xf]
    %v37 = vld [vmem:[%s0 + $0x34] sm:$0xf]
    %v38 = vld [vmem:[%s0 + $0x38] sm:$0xf]
    %v39 = vld [vmem:[%s0 + $0x3c] sm:$0xf]
    %v40 = vld [vmem:[%s1] sm:$0xff]
    %v41 = vld [vmem:[%s1 + $0x8] sm:$0xff]
    %v42 = vld [vmem:[%s1 + $0x10] sm:$0xff]
    %v43 = vld [vmem:[%s1 + $0x18] sm:$0xff]
    %v44 = vld [vmem:[%s1 + $0x20] sm:$0xff]
    %v45 = vld [vmem:[%s1 + $0x28] sm:$0xff]
    %v46 = vld [vmem:[%s1 + $0x30] sm:$0xff]
    %v47 = vld [vmem:[%s1 + $0x38] sm:$0xff]
    %v48 = vld [vmem:[%s2] sm:$0xf]
    %v50 = vlaneseq
    %v51 = vshrl.u32 %v50, 7
    %v52 = vsub.s32 0, %v51
    %v53 = vrot.slane %v48, %v52
    %v54 = vlaneseq
    %v55 = vshrl.u32 %v54, 7
    %v56 = vsub.s32 1, %v55
    %v57 = vrot.slane %v48, %v56
    %v58 = vlaneseq
    %v59 = vshrl.u32 %v58, 7
    %v60 = vsub.s32 2, %v59
    %v61 = vrot.slane %v48, %v60
    %v62 = vlaneseq
    %v63 = vshrl.u32 %v62, 7
    %v64 = vsub.s32 3, %v63
    %v65 = vrot.slane %v48, %v64
    %v86 = vunpack.c.l.b16 %v24
    %v87 = vunpack.c.l.b16 %v25
    %v88 = vunpack.c.l.b16 %v26
    %v89 = vunpack.c.l.b16 %v27
    %v90 = vunpack.c.l.b16 %v28
    %v91 = vunpack.c.l.b16 %v29
    %v92 = vunpack.c.l.b16 %v30
    %v93 = vunpack.c.l.b16 %v31
    %v94 = vunpack.c.l.b16 %v32
    %v95 = vunpack.c.l.b16 %v33
    %v96 = vunpack.c.l.b16 %v34
    %v97 = vunpack.c.l.b16 %v35
    %v98 = vunpack.c.l.b16 %v36
    %v99 = vunpack.c.l.b16 %v37
    %v100 = vunpack.c.l.b16 %v38
    %v101 = vunpack.c.l.b16 %v39
    %v102 = vpack.c.b16 %v87, %v86
    %v103 = vpack.c.b16 %v89, %v88
    %v104 = vpack.c.b16 %v91, %v90
    %v105 = vpack.c.b16 %v93, %v92
    %v106 = vpack.c.b16 %v95, %v94
    %v107 = vpack.c.b16 %v97, %v96
    %v108 = vpack.c.b16 %v99, %v98
    %v109 = vpack.c.b16 %v101, %v100
    %v118 = vunpack.c.l.b16 %v40
    %v119 = vunpack.c.h.b16 %v40
    %v120 = vunpack.c.l.b16 %v41
    %v121 = vunpack.c.h.b16 %v41
    %v122 = vunpack.c.l.b16 %v42
    %v123 = vunpack.c.h.b16 %v42
    %v124 = vunpack.c.l.b16 %v43
    %v125 = vunpack.c.h.b16 %v43
    %v126 = vunpack.c.l.b16 %v44
    %v127 = vunpack.c.h.b16 %v44
    %v128 = vunpack.c.l.b16 %v45
    %v129 = vunpack.c.h.b16 %v45
    %v130 = vunpack.c.l.b16 %v46
    %v131 = vunpack.c.h.b16 %v46
    %v132 = vunpack.c.l.b16 %v47
    %v133 = vunpack.c.h.b16 %v47
    %v134 = vpack.c.b16 %v122, %v118
    %v135 = vpack.c.b16 %v123, %v119
    %v136 = vpack.c.b16 %v124, %v120
    %v137 = vpack.c.b16 %v125, %v121
    %v138 = vpack.c.b16 %v130, %v126
    %v139 = vpack.c.b16 %v131, %v127
    %v140 = vpack.c.b16 %v132, %v128
    %v141 = vpack.c.b16 %v133, %v129
    %vm150 = vcmask 261120
    %v152 = vsel %vm150, %v102, 0
    %v155 = vsel %vm150, %v103, 0
    %v158 = vsel %vm150, %v104, 0
    %v161 = vsel %vm150, %v105, 0
    %v164 = vsel %vm150, %v106, 0
    %v167 = vsel %vm150, %v107, 0
    %v170 = vsel %vm150, %v108, 0
    %v173 = vsel %vm150, %v109, 0
    %175 = vmatprep.subr.bf16.mxu0 0
    %176 = vmatpush1.bf16.msra.mxu0 0
    %177 = vmatprep.subr.bf16.mxu0 0
    %178 = vmatpush1.bf16.msra.mxu0 0
    %179 = vmatprep.subr.bf16.mxu0 0
    %180 = vmatpush1.bf16.msra.mxu0 0
    %181 = vmatprep.subr.bf16.mxu0 0
    %182 = vmatpush1.bf16.msra.mxu0 0
    %183 = vmatprep.subr.bf16.mxu0 0
    %184 = vmatpush1.bf16.msra.mxu0 0
    %185 = vmatprep.subr.bf16.mxu0 0
    %186 = vmatpush1.bf16.msra.mxu0 0
    %187 = vmatprep.subr.bf16.mxu0 %v139
    %188 = vmatpush1.bf16.msra.mxu0 %v138
    %189 = vmatprep.subr.bf16.mxu0 %v135
    %190 = vmatpush1.bf16.msra.mxu0 %v134
    %191 = vmatprep.subr.bf16.mxu0 0
    %192 = vmatpush2.bf16.msra.mxu0 0
    %193 = vmatprep.subr.bf16.mxu0 0
    %194 = vmatpush2.bf16.msra.mxu0 0
    %195 = vmatprep.subr.bf16.mxu0 0
    %196 = vmatpush2.bf16.msra.mxu0 0
    %197 = vmatprep.subr.bf16.mxu0 0
    %198 = vmatpush2.bf16.msra.mxu0 0
    %199 = vmatprep.subr.bf16.mxu0 0
    %200 = vmatpush2.bf16.msra.mxu0 0
    %201 = vmatprep.subr.bf16.mxu0 0
    %202 = vmatpush2.bf16.msra.mxu0 0
    %203 = vmatprep.subr.bf16.mxu0 0
    %204 = vmatpush2.bf16.msra.mxu0 0
    %205 = vmatprep.subr.bf16.mxu0 0
    %206 = vmatpush2.bf16.msra.mxu0 0
    %207 = vmatprep.mubr.bf16.mxu0 0
    %208 = vmatmul.mubr.bf16.gmra.mxu0 %v152
    %v209 = vpop.f32.mrf.mxu0
    %v210 = vadd.f32 %v53, %v209
    %v211 = vpop.f32.mrf.mxu0
    %v212 = vadd.f32 %v57, %v211
    %v213 = vpop.f32.mrf.mxu0
    %v214 = vadd.f32 %v53, %v213
    %v215 = vpop.f32.mrf.mxu0
    %v216 = vadd.f32 %v57, %v215
    %217 = vmatprep.mubr.bf16.mxu0 0
    %218 = vmatmul.mubr.bf16.gmra.mxu0 %v155
    %v219 = vpop.f32.mrf.mxu0
    %v220 = vadd.f32 %v53, %v219
    %v221 = vpop.f32.mrf.mxu0
    %v222 = vadd.f32 %v57, %v221
    %v223 = vpop.f32.mrf.mxu0
    %v224 = vadd.f32 %v53, %v223
    %v225 = vpop.f32.mrf.mxu0
    %v226 = vadd.f32 %v57, %v225
    %227 = vmatprep.mubr.bf16.mxu0 0
    %228 = vmatmul.mubr.bf16.gmra.mxu0 %v158
    %v229 = vpop.f32.mrf.mxu0
    %v230 = vadd.f32 %v53, %v229
    %v231 = vpop.f32.mrf.mxu0
    %v232 = vadd.f32 %v57, %v231
    %v233 = vpop.f32.mrf.mxu0
    %v234 = vadd.f32 %v53, %v233
    %v235 = vpop.f32.mrf.mxu0
    %v236 = vadd.f32 %v57, %v235
    %237 = vmatprep.mubr.bf16.mxu0 0
    %238 = vmatmul.mubr.bf16.gmra.mxu0 %v161
    %v239 = vpop.f32.mrf.mxu0
    %v240 = vadd.f32 %v53, %v239
    %v241 = vpop.f32.mrf.mxu0
    %v242 = vadd.f32 %v57, %v241
    %v243 = vpop.f32.mrf.mxu0
    %v244 = vadd.f32 %v53, %v243
    %v245 = vpop.f32.mrf.mxu0
    %v246 = vadd.f32 %v57, %v245
    %247 = vmatprep.mubr.bf16.mxu0 0
    %248 = vmatmul.mubr.bf16.gmra.mxu0 %v164
    %v249 = vpop.f32.mrf.mxu0
    %v250 = vadd.f32 %v53, %v249
    %v251 = vpop.f32.mrf.mxu0
    %v252 = vadd.f32 %v57, %v251
    %v253 = vpop.f32.mrf.mxu0
    %v254 = vadd.f32 %v53, %v253
    %v255 = vpop.f32.mrf.mxu0
    %v256 = vadd.f32 %v57, %v255
    %257 = vmatprep.mubr.bf16.mxu0 0
    %258 = vmatmul.mubr.bf16.gmra.mxu0 %v167
    %v259 = vpop.f32.mrf.mxu0
    %v260 = vadd.f32 %v53, %v259
    %v261 = vpop.f32.mrf.mxu0
    %v262 = vadd.f32 %v57, %v261
    %v263 = vpop.f32.mrf.mxu0
    %v264 = vadd.f32 %v53, %v263
    %v265 = vpop.f32.mrf.mxu0
    %v266 = vadd.f32 %v57, %v265
    %267 = vmatprep.mubr.bf16.mxu0 0
    %268 = vmatmul.mubr.bf16.gmra.mxu0 %v170
    %v269 = vpop.f32.mrf.mxu0
    %v270 = vadd.f32 %v53, %v269
    %v271 = vpop.f32.mrf.mxu0
    %v272 = vadd.f32 %v57, %v271
    %v273 = vpop.f32.mrf.mxu0
    %v274 = vadd.f32 %v53, %v273
    %v275 = vpop.f32.mrf.mxu0
    %v276 = vadd.f32 %v57, %v275
    %277 = vmatprep.mubr.bf16.mxu0 0
    %278 = vmatmul.mubr.bf16.gmra.mxu0 %v173
    %v279 = vpop.f32.mrf.mxu0
    %v280 = vadd.f32 %v53, %v279
    %v281 = vpop.f32.mrf.mxu0
    %v282 = vadd.f32 %v57, %v281
    %v283 = vpop.f32.mrf.mxu0
    %v284 = vadd.f32 %v53, %v283
    %v285 = vpop.f32.mrf.mxu0
    %v286 = vadd.f32 %v57, %v285
    %287 = vdwg.mxu0
    %288 = vmatprep.subr.bf16.mxu0 0
    %289 = vmatpush1.bf16.msra.mxu0 0
    %290 = vmatprep.subr.bf16.mxu0 0
    %291 = vmatpush1.bf16.msra.mxu0 0
    %292 = vmatprep.subr.bf16.mxu0 0
    %293 = vmatpush1.bf16.msra.mxu0 0
    %294 = vmatprep.subr.bf16.mxu0 0
    %295 = vmatpush1.bf16.msra.mxu0 0
    %296 = vmatprep.subr.bf16.mxu0 0
    %297 = vmatpush1.bf16.msra.mxu0 0
    %298 = vmatprep.subr.bf16.mxu0 0
    %299 = vmatpush1.bf16.msra.mxu0 0
    %300 = vmatprep.subr.bf16.mxu0 %v141
    %301 = vmatpush1.bf16.msra.mxu0 %v140
    %302 = vmatprep.subr.bf16.mxu0 %v137
    %303 = vmatpush1.bf16.msra.mxu0 %v136
    %304 = vmatprep.subr.bf16.mxu0 0
    %305 = vmatpush2.bf16.msra.mxu0 0
    %306 = vmatprep.subr.bf16.mxu0 0
    %307 = vmatpush2.bf16.msra.mxu0 0
    %308 = vmatprep.subr.bf16.mxu0 0
    %309 = vmatpush2.bf16.msra.mxu0 0
    %310 = vmatprep.subr.bf16.mxu0 0
    %311 = vmatpush2.bf16.msra.mxu0 0
    %312 = vmatprep.subr.bf16.mxu0 0
    %313 = vmatpush2.bf16.msra.mxu0 0
    %314 = vmatprep.subr.bf16.mxu0 0
    %315 = vmatpush2.bf16.msra.mxu0 0
    %316 = vmatprep.subr.bf16.mxu0 0
    %317 = vmatpush2.bf16.msra.mxu0 0
    %318 = vmatprep.subr.bf16.mxu0 0
    %319 = vmatpush2.bf16.msra.mxu0 0
    %320 = vmatprep.mubr.bf16.mxu0 0
    %321 = vmatmul.mubr.bf16.gmra.mxu0 %v152
    %v322 = vpop.f32.mrf.mxu0
    %v323 = vadd.f32 %v61, %v322
    %v324 = vpop.f32.mrf.mxu0
    %v325 = vadd.f32 %v65, %v324
    %v326 = vpop.f32.mrf.mxu0
    %v327 = vadd.f32 %v61, %v326
    %v328 = vpop.f32.mrf.mxu0
    %v329 = vadd.f32 %v65, %v328
    %330 = vmatprep.mubr.bf16.mxu0 0
    %331 = vmatmul.mubr.bf16.gmra.mxu0 %v155
    %v332 = vpop.f32.mrf.mxu0
    %v333 = vadd.f32 %v61, %v332
    %v334 = vpop.f32.mrf.mxu0
    %v335 = vadd.f32 %v65, %v334
    %v336 = vpop.f32.mrf.mxu0
    %v337 = vadd.f32 %v61, %v336
    %v338 = vpop.f32.mrf.mxu0
    %v339 = vadd.f32 %v65, %v338
    %340 = vmatprep.mubr.bf16.mxu0 0
    %341 = vmatmul.mubr.bf16.gmra.mxu0 %v158
    %v342 = vpop.f32.mrf.mxu0
    %v343 = vadd.f32 %v61, %v342
    %v344 = vpop.f32.mrf.mxu0
    %v345 = vadd.f32 %v65, %v344
    %v346 = vpop.f32.mrf.mxu0
    %v347 = vadd.f32 %v61, %v346
    %v348 = vpop.f32.mrf.mxu0
    %v349 = vadd.f32 %v65, %v348
    %350 = vmatprep.mubr.bf16.mxu0 0
    %351 = vmatmul.mubr.bf16.gmra.mxu0 %v161
    %v352 = vpop.f32.mrf.mxu0
    %v353 = vadd.f32 %v61, %v352
    %v354 = vpop.f32.mrf.mxu0
    %v355 = vadd.f32 %v65, %v354
    %v356 = vpop.f32.mrf.mxu0
    %v357 = vadd.f32 %v61, %v356
    %v358 = vpop.f32.mrf.mxu0
    %v359 = vadd.f32 %v65, %v358
    %360 = vmatprep.mubr.bf16.mxu0 0
    %361 = vmatmul.mubr.bf16.gmra.mxu0 %v164
    %v362 = vpop.f32.mrf.mxu0
    %v363 = vadd.f32 %v61, %v362
    %v364 = vpop.f32.mrf.mxu0
    %v365 = vadd.f32 %v65, %v364
    %v366 = vpop.f32.mrf.mxu0
    %v367 = vadd.f32 %v61, %v366
    %v368 = vpop.f32.mrf.mxu0
    %v369 = vadd.f32 %v65, %v368
    %370 = vmatprep.mubr.bf16.mxu0 0
    %371 = vmatmul.mubr.bf16.gmra.mxu0 %v167
    %v372 = vpop.f32.mrf.mxu0
    %v373 = vadd.f32 %v61, %v372
    %v374 = vpop.f32.mrf.mxu0
    %v375 = vadd.f32 %v65, %v374
    %v376 = vpop.f32.mrf.mxu0
    %v377 = vadd.f32 %v61, %v376
    %v378 = vpop.f32.mrf.mxu0
    %v379 = vadd.f32 %v65, %v378
    %380 = vmatprep.mubr.bf16.mxu0 0
    %381 = vmatmul.mubr.bf16.gmra.mxu0 %v170
    %v382 = vpop.f32.mrf.mxu0
    %v383 = vadd.f32 %v61, %v382
    %v384 = vpop.f32.mrf.mxu0
    %v385 = vadd.f32 %v65, %v384
    %v386 = vpop.f32.mrf.mxu0
    %v387 = vadd.f32 %v61, %v386
    %v388 = vpop.f32.mrf.mxu0
    %v389 = vadd.f32 %v65, %v388
    %390 = vmatprep.mubr.bf16.mxu0 0
    %391 = vmatmul.mubr.bf16.gmra.mxu0 %v173
    %v392 = vpop.f32.mrf.mxu0
    %v393 = vadd.f32 %v61, %v392
    %v394 = vpop.f32.mrf.mxu0
    %v395 = vadd.f32 %v65, %v394
    %v396 = vpop.f32.mrf.mxu0
    %v397 = vadd.f32 %v61, %v396
    %v398 = vpop.f32.mrf.mxu0
    %v399 = vadd.f32 %v65, %v398
    %400 = vdwg.mxu0
    %v401 = vmax.f32 %v210, 0.0
    %v402 = vmax.f32 %v212, 0.0
    %v403 = vmax.f32 %v323, 0.0
    %v404 = vmax.f32 %v325, 0.0
    %v405 = vmax.f32 %v214, 0.0
    %v406 = vmax.f32 %v216, 0.0
    %v407 = vmax.f32 %v327, 0.0
    %v408 = vmax.f32 %v329, 0.0
    %v409 = vmax.f32 %v220, 0.0
    %v410 = vmax.f32 %v222, 0.0
    %v411 = vmax.f32 %v333, 0.0
    %v412 = vmax.f32 %v335, 0.0
    %v413 = vmax.f32 %v224, 0.0
    %v414 = vmax.f32 %v226, 0.0
    %v415 = vmax.f32 %v337, 0.0
    %v416 = vmax.f32 %v339, 0.0
    %v417 = vmax.f32 %v230, 0.0
    %v418 = vmax.f32 %v232, 0.0
    %v419 = vmax.f32 %v343, 0.0
    %v420 = vmax.f32 %v345, 0.0
    %v421 = vmax.f32 %v234, 0.0
    %v422 = vmax.f32 %v236, 0.0
    %v423 = vmax.f32 %v347, 0.0
    %v424 = vmax.f32 %v349, 0.0
    %v425 = vmax.f32 %v240, 0.0
    %v426 = vmax.f32 %v242, 0.0
    %v427 = vmax.f32 %v353, 0.0
    %v428 = vmax.f32 %v355, 0.0
    %v429 = vmax.f32 %v244, 0.0
    %v430 = vmax.f32 %v246, 0.0
    %v431 = vmax.f32 %v357, 0.0
    %v432 = vmax.f32 %v359, 0.0
    %v433 = vmax.f32 %v250, 0.0
    %v434 = vmax.f32 %v252, 0.0
    %v435 = vmax.f32 %v363, 0.0
    %v436 = vmax.f32 %v365, 0.0
    %v437 = vmax.f32 %v254, 0.0
    %v438 = vmax.f32 %v256, 0.0
    %v439 = vmax.f32 %v367, 0.0
    %v440 = vmax.f32 %v369, 0.0
    %v441 = vmax.f32 %v260, 0.0
    %v442 = vmax.f32 %v262, 0.0
    %v443 = vmax.f32 %v373, 0.0
    %v444 = vmax.f32 %v375, 0.0
    %v445 = vmax.f32 %v264, 0.0
    %v446 = vmax.f32 %v266, 0.0
    %v447 = vmax.f32 %v377, 0.0
    %v448 = vmax.f32 %v379, 0.0
    %v449 = vmax.f32 %v270, 0.0
    %v450 = vmax.f32 %v272, 0.0
    %v451 = vmax.f32 %v383, 0.0
    %v452 = vmax.f32 %v385, 0.0
    %v453 = vmax.f32 %v274, 0.0
    %v454 = vmax.f32 %v276, 0.0
    %v455 = vmax.f32 %v387, 0.0
    %v456 = vmax.f32 %v389, 0.0
    %v457 = vmax.f32 %v280, 0.0
    %v458 = vmax.f32 %v282, 0.0
    %v459 = vmax.f32 %v393, 0.0
    %v460 = vmax.f32 %v395, 0.0
    %v461 = vmax.f32 %v284, 0.0
    %v462 = vmax.f32 %v286, 0.0
    %v463 = vmax.f32 %v397, 0.0
    %v464 = vmax.f32 %v399, 0.0
    %v465 = vld [vmem:[%s3] sm:$0xf]
    %v466 = vld [vmem:[#allocation2] sm:$0x1]
    %468 = vset.pattern.permute.xlu0 0
    %469 = vperm.xlu0 %468, %v466
    %v470 = vpop.permute.xlu0 %469
    %v472 = vlaneseq
    %v473 = vshrl.u32 %v472, 7
    %v474 = vsub.s32 0, %v473
    %v475 = vrot.slane %v470, %v474
    %v477 = vlaneseq
    %v478 = vshrl.u32 %v477, 7
    %v479 = vsub.s32 0, %v478
    %v480 = vrot.slane %v465, %v479
    %v481 = vlaneseq
    %v482 = vshrl.u32 %v481, 7
    %v483 = vsub.s32 1, %v482
    %v484 = vrot.slane %v465, %v483
    %v485 = vlaneseq
    %v486 = vshrl.u32 %v485, 7
    %v487 = vsub.s32 2, %v486
    %v488 = vrot.slane %v465, %v487
    %v489 = vlaneseq
    %v490 = vshrl.u32 %v489, 7
    %v491 = vsub.s32 3, %v490
    %v492 = vrot.slane %v465, %v491
    %497 = vmatprep.subr.mxu0 %v462
    %498 = vmatpush1.xpose.msra.mxu0 %v461
    %499 = vmatprep.subr.mxu0 %v458
    %500 = vmatpush1.xpose.msra.mxu0 %v457
    %501 = vmatprep.subr.mxu0 %v454
    %502 = vmatpush1.xpose.msra.mxu0 %v453
    %503 = vmatprep.subr.mxu0 %v450
    %504 = vmatpush1.xpose.msra.mxu0 %v449
    %505 = vmatprep.subr.mxu0 %v446
    %506 = vmatpush1.xpose.msra.mxu0 %v445
    %507 = vmatprep.subr.mxu0 %v442
    %508 = vmatpush1.xpose.msra.mxu0 %v441
    %509 = vmatprep.subr.mxu0 %v438
    %510 = vmatpush1.xpose.msra.mxu0 %v437
    %511 = vmatprep.subr.mxu0 %v434
    %512 = vmatpush1.xpose.msra.mxu0 %v433
    %513 = vmatprep.subr.mxu0 %v430
    %514 = vmatpush1.xpose.msra.mxu0 %v429
    %515 = vmatprep.subr.mxu0 %v426
    %516 = vmatpush1.xpose.msra.mxu0 %v425
    %517 = vmatprep.subr.mxu0 %v422
    %518 = vmatpush1.xpose.msra.mxu0 %v421
    %519 = vmatprep.subr.mxu0 %v418
    %520 = vmatpush1.xpose.msra.mxu0 %v417
    %521 = vmatprep.subr.mxu0 %v414
    %522 = vmatpush1.xpose.msra.mxu0 %v413
    %523 = vmatprep.subr.mxu0 %v410
    %524 = vmatpush1.xpose.msra.mxu0 %v409
    %525 = vmatprep.subr.mxu0 %v406
    %526 = vmatpush1.xpose.msra.mxu0 %v405
    %527 = vmatprep.subr.mxu0 %v402
    %528 = vmatpush1.xpose.msra.mxu0 %v401
    %529 = vmatprep.subr.mxu0 0.0
    %530 = vmatpush2.xpose.msra.mxu0 0.0
    %531 = vmatprep.subr.mxu0 0.0
    %532 = vmatpush2.xpose.msra.mxu0 0.0
    %533 = vmatprep.subr.mxu0 0.0
    %534 = vmatpush2.xpose.msra.mxu0 0.0
    %535 = vmatprep.subr.mxu0 0.0
    %536 = vmatpush2.xpose.msra.mxu0 0.0
    %537 = vmatprep.subr.mxu0 0.0
    %538 = vmatpush2.xpose.msra.mxu0 0.0
    %539 = vmatprep.subr.mxu0 0.0
    %540 = vmatpush2.xpose.msra.mxu0 0.0
    %541 = vmatprep.subr.mxu0 0.0
    %542 = vmatpush2.xpose.msra.mxu0 0.0
    %543 = vmatprep.subr.mxu0 0.0
    %544 = vmatpush2.xpose.msra.mxu0 0.0
    %545 = vmatprep.subr.mxu0 0.0
    %546 = vmatpush2.xpose.msra.mxu0 0.0
    %547 = vmatprep.subr.mxu0 0.0
    %548 = vmatpush2.xpose.msra.mxu0 0.0
    %549 = vmatprep.subr.mxu0 0.0
    %550 = vmatpush2.xpose.msra.mxu0 0.0
    %551 = vmatprep.subr.mxu0 0.0
    %552 = vmatpush2.xpose.msra.mxu0 0.0
    %553 = vmatprep.subr.mxu0 0.0
    %554 = vmatpush2.xpose.msra.mxu0 0.0
    %555 = vmatprep.subr.mxu0 0.0
    %556 = vmatpush2.xpose.msra.mxu0 0.0
    %557 = vmatprep.subr.mxu0 0.0
    %558 = vmatpush2.xpose.msra.mxu0 0.0
    %559 = vmatprep.subr.mxu0 0.0
    %560 = vmatpush2.xpose.msra.mxu0 0.0
    %561 = vmatprep.mubr.f32.mxu0 %v484
    %562 = vmatmul.mubr.f32.gmra.mxu0 %v480
    %v563 = vpop.f32.mrf.mxu0
    %v564 = vadd.f32 %v475, %v563
    %v565 = vpop.f32.mrf.mxu0
    %566 = vdwg.mxu0
    %567 = vmatprep.subr.mxu0 %v464
    %568 = vmatpush1.xpose.msra.mxu0 %v463
    %569 = vmatprep.subr.mxu0 %v460
    %570 = vmatpush1.xpose.msra.mxu0 %v459
    %571 = vmatprep.subr.mxu0 %v456
    %572 = vmatpush1.xpose.msra.mxu0 %v455
    %573 = vmatprep.subr.mxu0 %v452
    %574 = vmatpush1.xpose.msra.mxu0 %v451
    %575 = vmatprep.subr.mxu0 %v448
    %576 = vmatpush1.xpose.msra.mxu0 %v447
    %577 = vmatprep.subr.mxu0 %v444
    %578 = vmatpush1.xpose.msra.mxu0 %v443
    %579 = vmatprep.subr.mxu0 %v440
    %580 = vmatpush1.xpose.msra.mxu0 %v439
    %581 = vmatprep.subr.mxu0 %v436
    %582 = vmatpush1.xpose.msra.mxu0 %v435
    %583 = vmatprep.subr.mxu0 %v432
    %584 = vmatpush1.xpose.msra.mxu0 %v431
    %585 = vmatprep.subr.mxu0 %v428
    %586 = vmatpush1.xpose.msra.mxu0 %v427
    %587 = vmatprep.subr.mxu0 %v424
    %588 = vmatpush1.xpose.msra.mxu0 %v423
    %589 = vmatprep.subr.mxu0 %v420
    %590 = vmatpush1.xpose.msra.mxu0 %v419
    %591 = vmatprep.subr.mxu0 %v416
    %592 = vmatpush1.xpose.msra.mxu0 %v415
    %593 = vmatprep.subr.mxu0 %v412
    %594 = vmatpush1.xpose.msra.mxu0 %v411
    %595 = vmatprep.subr.mxu0 %v408
    %596 = vmatpush1.xpose.msra.mxu0 %v407
    %597 = vmatprep.subr.mxu0 %v404
    %598 = vmatpush1.xpose.msra.mxu0 %v403
    %599 = vmatprep.subr.mxu0 0.0
    %600 = vmatpush2.xpose.msra.mxu0 0.0
    %601 = vmatprep.subr.mxu0 0.0
    %602 = vmatpush2.xpose.msra.mxu0 0.0
    %603 = vmatprep.subr.mxu0 0.0
    %604 = vmatpush2.xpose.msra.mxu0 0.0
    %605 = vmatprep.subr.mxu0 0.0
    %606 = vmatpush2.xpose.msra.mxu0 0.0
    %607 = vmatprep.subr.mxu0 0.0
    %608 = vmatpush2.xpose.msra.mxu0 0.0
    %609 = vmatprep.subr.mxu0 0.0
    %610 = vmatpush2.xpose.msra.mxu0 0.0
    %611 = vmatprep.subr.mxu0 0.0
    %612 = vmatpush2.xpose.msra.mxu0 0.0
    %613 = vmatprep.subr.mxu0 0.0
    %614 = vmatpush2.xpose.msra.mxu0 0.0
    %615 = vmatprep.subr.mxu0 0.0
    %616 = vmatpush2.xpose.msra.mxu0 0.0
    %617 = vmatprep.subr.mxu0 0.0
    %618 = vmatpush2.xpose.msra.mxu0 0.0
    %619 = vmatprep.subr.mxu0 0.0
    %620 = vmatpush2.xpose.msra.mxu0 0.0
    %621 = vmatprep.subr.mxu0 0.0
    %622 = vmatpush2.xpose.msra.mxu0 0.0
    %623 = vmatprep.subr.mxu0 0.0
    %624 = vmatpush2.xpose.msra.mxu0 0.0
    %625 = vmatprep.subr.mxu0 0.0
    %626 = vmatpush2.xpose.msra.mxu0 0.0
    %627 = vmatprep.subr.mxu0 0.0
    %628 = vmatpush2.xpose.msra.mxu0 0.0
    %629 = vmatprep.subr.mxu0 0.0
    %630 = vmatpush2.xpose.msra.mxu0 0.0
    %631 = vmatprep.mubr.f32.mxu0 %v492
    %632 = vmatmul.mubr.f32.gmra.mxu0 %v488
    %v633 = vpop.f32.mrf.mxu0
    %v634 = vadd.f32 %v564, %v633
    %v635 = vpop.f32.mrf.mxu0
    %636 = vdwg.mxu0
    %637 = vst [vmem:[#allocation3] sm:$0x1] %v634
    // Predicated region
    $region22: #{tpu_custom_call.1} parent=1 // pred_check
      _
    $region23: #{tpu_custom_call.1} parent=1 // pred_check_branch
      %639 = sbr.rel (0) target = $region25
    $region24: #{tpu_custom_call.1} parent=1 // pred_region
      %s641 = ssub.s32 16, 16
      %642 = vsyncadd [#allocation4], %s641
      %s644 = sshll.u32 [#allocation3], 4
      %s645 = int_to_ptr.vmem [resolvable:$true] %s644
      %647 = dma.vmem_to_hbm [thread:$0]  %s645, 16, %s5, [#allocation4]
    $region25: #{tpu_custom_call.1} parent=1 // pred_fallthru
      _
    // Predicated region
    $region26: #{tpu_custom_call.1} parent=1 // pred_check
      _
    $region27: #{tpu_custom_call.1} parent=1 // pred_check_branch
      %649 = sbr.rel (0) target = $region29
    $region28: #{tpu_custom_call.1} parent=1 // pred_region
      %650 = dma.done [#allocation4], 16
    $region29: #{tpu_custom_call.1} parent=1 // pred_fallthru
      _
    %651 = vsyncpa [#allocation4], 1

// kernel: tpu_custom_call.1
$region0: #{tpu_custom_call.1}
  #allocation0 [shape = 'u32[]', space=smem, size = 0x4, offset = 0x4, fixed_abs, tag = 'smem constant byte address 0x4 - core index']
  #allocation1 [shape = 'u32[144,128]{1,0:T(1,128)}', space=vmem, size = 0x12000, scoped, tag = 'internal scratch']
  #allocation2 [shape = 'f32[1,1]{1,0:T(1,128)S(1)}', space=vmem, size = 0x200, scoped, tag = 'scoped memory for tpu_custom_call.1']
  %s0 = inlined_call_operand.vmem [shape: bf16[128,32], index: 0, kind: input, shape index: {}]
  %s1 = inlined_call_operand.vmem [shape: bf16[32,512], index: 1, kind: input, shape index: {}]
  %s2 = inlined_call_operand.vmem [shape: f32[1,512], index: 2, kind: input, shape index: {}]
  %s3 = inlined_call_operand.vmem [shape: f32[1,512], index: 3, kind: input, shape index: {}]
  %s4 = inlined_call_operand.<no memory space> [shape: f32[1,1], index: 4, kind: input, shape index: {}]
  %s5 = inlined_call_operand.hbm [shape: f32[1,128], index: 5, kind: output, shape index: {}]
  %s6 = sld [smem:[#allocation0]]
  $region30: #{tpu_custom_call.1} parent=0
    _
  %s8 = ssub.s32 1, %s6
  %s9 = scalar_select 0, %s8, %s6
  %v10 = vstv %s4
  %11 = vst [vmem:[#allocation2] sm:$0x1] %v10
  $region1: #{tpu_custom_call.1} parent=0
    #allocation3 [shape = 'u8[512]{0}', space=vmem, size = 0x400, scoped, tag = 'output window, operand 0, single buffered']
    #allocation4 [shape = 's32[1]{0}', space=sflag, size = 0x4, scoped, tag = 'scoped memory for tpu_custom_call.1']
    %12 = vsyncpa [#allocation4], 0
    // Predicated region
    $region2: #{tpu_custom_call.1} parent=1 // pred_check
      _
    $region3: #{tpu_custom_call.1} parent=1 // pred_check_branch
      %14 = sbr.rel (0) target = $region5
    $region4: #{tpu_custom_call.1} parent=1 // pred_region
      _
    $region5: #{tpu_custom_call.1} parent=1 // pred_fallthru
      _
    // Predicated region
    $region6: #{tpu_custom_call.1} parent=1 // pred_check
      _
    $region7: #{tpu_custom_call.1} parent=1 // pred_check_branch
      %16 = sbr.rel (0) target = $region9
    $region8: #{tpu_custom_call.1} parent=1 // pred_region
      _
    $region9: #{tpu_custom_call.1} parent=1 // pred_fallthru
      _
    // Predicated region
    $region10: #{tpu_custom_call.1} parent=1 // pred_check
      _
    $region11: #{tpu_custom_call.1} parent=1 // pred_check_branch
      %18 = sbr.rel (0) target = $region13
    $region12: #{tpu_custom_call.1} parent=1 // pred_region
      _
    $region13: #{tpu_custom_call.1} parent=1 // pred_fallthru
      _
    // Predicated region
    $region14: #{tpu_custom_call.1} parent=1 // pred_check
      _
    $region15: #{tpu_custom_call.1} parent=1 // pred_check_branch
      %20 = sbr.rel (0) target = $region17
    $region16: #{tpu_custom_call.1} parent=1 // pred_region
      _
    $region17: #{tpu_custom_call.1} parent=1 // pred_fallthru
      _
    // Predicated region
    $region18: #{tpu_custom_call.1} parent=1 // pred_check
      _
    $region19: #{tpu_custom_call.1} parent=1 // pred_check_branch
      %22 = sbr.rel (0) target = $region21
    $region20: #{tpu_custom_call.1} parent=1 // pred_region
      _
    $region21: #{tpu_custom_call.1} parent=1 // pred_fallthru
      _
    %v24 = vld [vmem:[%s0] sm:$0xf]
    %v25 = vld [vmem:[%s0 + $0x4] sm:$0xf]
    %v26 = vld [vmem:[%s0 + $0x8] sm:$0xf]
    %v27 = vld [vmem:[%s0 + $0xc] sm:$0xf]
    %v28 = vld [vmem:[%s0 + $0x10] sm:$0xf]
    %v29 = vld [vmem:[%s0 + $0x14] sm:$0xf]
    %v30 = vld [vmem:[%s0 + $0x18] sm:$0xf]
    %v31 = vld [vmem:[%s0 + $0x1c] sm:$0xf]
    %v32 = vld [vmem:[%s0 + $0x20] sm:$0xf]
    %v33 = vld [vmem:[%s0 + $0x24] sm:$0xf]
    %v34 = vld [vmem:[%s0 + $0x28] sm:$0xf]
    %v35 = vld [vmem:[%s0 + $0x2c] sm:$0xf]
    %v36 = vld [vmem:[%s0 + $0x30] sm:$0xf]
    %v37 = vld [vmem:[%s0 + $0x34] sm:$0xf]
    %v38 = vld [vmem:[%s0 + $0x38] sm:$0xf]
    %v39 = vld [vmem:[%s0 + $0x3c] sm:$0xf]
    %v40 = vld [vmem:[%s1] sm:$0xff]
    %v41 = vld [vmem:[%s1 + $0x8] sm:$0xff]
    %v42 = vld [vmem:[%s1 + $0x10] sm:$0xff]
    %v43 = vld [vmem:[%s1 + $0x18] sm:$0xff]
    %v44 = vld [vmem:[%s1 + $0x20] sm:$0xff]
    %v45 = vld [vmem:[%s1 + $0x28] sm:$0xff]
    %v46 = vld [vmem:[%s1 + $0x30] sm:$0xff]
    %v47 = vld [vmem:[%s1 + $0x38] sm:$0xff]
    %v48 = vld [vmem:[%s2] sm:$0xf]
    %v50 = vlaneseq
    %v51 = vshrl.u32 %v50, 7
    %v52 = vsub.s32 0, %v51
    %v53 = vrot.slane %v48, %v52
    %v54 = vlaneseq
    %v55 = vshrl.u32 %v54, 7
    %v56 = vsub.s32 1, %v55
    %v57 = vrot.slane %v48, %v56
    %v58 = vlaneseq
    %v59 = vshrl.u32 %v58, 7
    %v60 = vsub.s32 2, %v59
    %v61 = vrot.slane %v48, %v60
    %v62 = vlaneseq
    %v63 = vshrl.u32 %v62, 7
    %v64 = vsub.s32 3, %v63
    %v65 = vrot.slane %v48, %v64
    %v86 = vunpack.c.l.b16 %v24
    %v87 = vunpack.c.l.b16 %v25
    %v88 = vunpack.c.l.b16 %v26
    %v89 = vunpack.c.l.b16 %v27
    %v90 = vunpack.c.l.b16 %v28
    %v91 = vunpack.c.l.b16 %v29
    %v92 = vunpack.c.l.b16 %v30
    %v93 = vunpack.c.l.b16 %v31
    %v94 = vunpack.c.l.b16 %v32
    %v95 = vunpack.c.l.b16 %v33
    %v96 = vunpack.c.l.b16 %v34
    %v97 = vunpack.c.l.b16 %v35
    %v98 = vunpack.c.l.b16 %v36
    %v99 = vunpack.c.l.b16 %v37
    %v100 = vunpack.c.l.b16 %v38
    %v101 = vunpack.c.l.b16 %v39
    %v102 = vpack.c.b16 %v87, %v86
    %v103 = vpack.c.b16 %v89, %v88
    %v104 = vpack.c.b16 %v91, %v90
    %v105 = vpack.c.b16 %v93, %v92
    %v106 = vpack.c.b16 %v95, %v94
    %v107 = vpack.c.b16 %v97, %v96
    %v108 = vpack.c.b16 %v99, %v98
    %v109 = vpack.c.b16 %v101, %v100
    %v118 = vunpack.c.l.b16 %v40
    %v119 = vunpack.c.h.b16 %v40
    %v120 = vunpack.c.l.b16 %v41
    %v121 = vunpack.c.h.b16 %v41
    %v122 = vunpack.c.l.b16 %v42
    %v123 = vunpack.c.h.b16 %v42
    %v124 = vunpack.c.l.b16 %v43
    %v125 = vunpack.c.h.b16 %v43
    %v126 = vunpack.c.l.b16 %v44
    %v127 = vunpack.c.h.b16 %v44
    %v128 = vunpack.c.l.b16 %v45
    %v129 = vunpack.c.h.b16 %v45
    %v130 = vunpack.c.l.b16 %v46
    %v131 = vunpack.c.h.b16 %v46
    %v132 = vunpack.c.l.b16 %v47
    %v133 = vunpack.c.h.b16 %v47
    %v134 = vpack.c.b16 %v122, %v118
    %v135 = vpack.c.b16 %v123, %v119
    %v136 = vpack.c.b16 %v124, %v120
    %v137 = vpack.c.b16 %v125, %v121
    %v138 = vpack.c.b16 %v130, %v126
    %v139 = vpack.c.b16 %v131, %v127
    %v140 = vpack.c.b16 %v132, %v128
    %v141 = vpack.c.b16 %v133, %v129
    %vm150 = vcmask 261120
    %v152 = vsel %vm150, %v102, 0
    %v155 = vsel %vm150, %v103, 0
    %v158 = vsel %vm150, %v104, 0
    %v161 = vsel %vm150, %v105, 0
    %v164 = vsel %vm150, %v106, 0
    %v167 = vsel %vm150, %v107, 0
    %v170 = vsel %vm150, %v108, 0
    %v173 = vsel %vm150, %v109, 0
    %175 = vmatprep.subr.bf16.mxu0 0
    %176 = vmatpush1.bf16.msra.mxu0 0
    %177 = vmatprep.subr.bf16.mxu0 0
    %178 = vmatpush1.bf16.msra.mxu0 0
    %179 = vmatprep.subr.bf16.mxu0 0
    %180 = vmatpush1.bf16.msra.mxu0 0
    %181 = vmatprep.subr.bf16.mxu0 0
    %182 = vmatpush1.bf16.msra.mxu0 0
    %183 = vmatprep.subr.bf16.mxu0 0
    %184 = vmatpush1.bf16.msra.mxu0 0
    %185 = vmatprep.subr.bf16.mxu0 0
    %186 = vmatpush1.bf16.msra.mxu0 0
    %187 = vmatprep.subr.bf16.mxu0 %v139
    %188 = vmatpush1.bf16.msra.mxu0 %v138
    %189 = vmatprep.subr.bf16.mxu0 %v135
    %190 = vmatpush1.bf16.msra.mxu0 %v134
    %191 = vmatprep.subr.bf16.mxu0 0
    %192 = vmatpush2.bf16.msra.mxu0 0
    %193 = vmatprep.subr.bf16.mxu0 0
    %194 = vmatpush2.bf16.msra.mxu0 0
    %195 = vmatprep.subr.bf16.mxu0 0
    %196 = vmatpush2.bf16.msra.mxu0 0
    %197 = vmatprep.subr.bf16.mxu0 0
    %198 = vmatpush2.bf16.msra.mxu0 0
    %199 = vmatprep.subr.bf16.mxu0 0
    %200 = vmatpush2.bf16.msra.mxu0 0
    %201 = vmatprep.subr.bf16.mxu0 0
    %202 = vmatpush2.bf16.msra.mxu0 0
    %203 = vmatprep.subr.bf16.mxu0 0
    %204 = vmatpush2.bf16.msra.mxu0 0
    %205 = vmatprep.subr.bf16.mxu0 0
    %206 = vmatpush2.bf16.msra.mxu0 0
    %207 = vmatprep.mubr.bf16.mxu0 0
    %208 = vmatmul.mubr.bf16.gmra.mxu0 %v152
    %v209 = vpop.f32.mrf.mxu0
    %v210 = vadd.f32 %v53, %v209
    %v211 = vpop.f32.mrf.mxu0
    %v212 = vadd.f32 %v57, %v211
    %v213 = vpop.f32.mrf.mxu0
    %v214 = vadd.f32 %v53, %v213
    %v215 = vpop.f32.mrf.mxu0
    %v216 = vadd.f32 %v57, %v215
    %217 = vmatprep.mubr.bf16.mxu0 0
    %218 = vmatmul.mubr.bf16.gmra.mxu0 %v155
    %v219 = vpop.f32.mrf.mxu0
    %v220 = vadd.f32 %v53, %v219
    %v221 = vpop.f32.mrf.mxu0
    %v222 = vadd.f32 %v57, %v221
    %v223 = vpop.f32.mrf.mxu0
    %v224 = vadd.f32 %v53, %v223
    %v225 = vpop.f32.mrf.mxu0
    %v226 = vadd.f32 %v57, %v225
    %227 = vmatprep.mubr.bf16.mxu0 0
    %228 = vmatmul.mubr.bf16.gmra.mxu0 %v158
    %v229 = vpop.f32.mrf.mxu0
    %v230 = vadd.f32 %v53, %v229
    %v231 = vpop.f32.mrf.mxu0
    %v232 = vadd.f32 %v57, %v231
    %v233 = vpop.f32.mrf.mxu0
    %v234 = vadd.f32 %v53, %v233
    %v235 = vpop.f32.mrf.mxu0
    %v236 = vadd.f32 %v57, %v235
    %237 = vmatprep.mubr.bf16.mxu0 0
    %238 = vmatmul.mubr.bf16.gmra.mxu0 %v161
    %v239 = vpop.f32.mrf.mxu0
    %v240 = vadd.f32 %v53, %v239
    %v241 = vpop.f32.mrf.mxu0
    %v242 = vadd.f32 %v57, %v241
    %v243 = vpop.f32.mrf.mxu0
    %v244 = vadd.f32 %v53, %v243
    %v245 = vpop.f32.mrf.mxu0
    %v246 = vadd.f32 %v57, %v245
    %247 = vmatprep.mubr.bf16.mxu0 0
    %248 = vmatmul.mubr.bf16.gmra.mxu0 %v164
    %v249 = vpop.f32.mrf.mxu0
    %v250 = vadd.f32 %v53, %v249
    %v251 = vpop.f32.mrf.mxu0
    %v252 = vadd.f32 %v57, %v251
    %v253 = vpop.f32.mrf.mxu0
    %v254 = vadd.f32 %v53, %v253
    %v255 = vpop.f32.mrf.mxu0
    %v256 = vadd.f32 %v57, %v255
    %257 = vmatprep.mubr.bf16.mxu0 0
    %258 = vmatmul.mubr.bf16.gmra.mxu0 %v167
    %v259 = vpop.f32.mrf.mxu0
    %v260 = vadd.f32 %v53, %v259
    %v261 = vpop.f32.mrf.mxu0
    %v262 = vadd.f32 %v57, %v261
    %v263 = vpop.f32.mrf.mxu0
    %v264 = vadd.f32 %v53, %v263
    %v265 = vpop.f32.mrf.mxu0
    %v266 = vadd.f32 %v57, %v265
    %267 = vmatprep.mubr.bf16.mxu0 0
    %268 = vmatmul.mubr.bf16.gmra.mxu0 %v170
    %v269 = vpop.f32.mrf.mxu0
    %v270 = vadd.f32 %v53, %v269
    %v271 = vpop.f32.mrf.mxu0
    %v272 = vadd.f32 %v57, %v271
    %v273 = vpop.f32.mrf.mxu0
    %v274 = vadd.f32 %v53, %v273
    %v275 = vpop.f32.mrf.mxu0
    %v276 = vadd.f32 %v57, %v275
    %277 = vmatprep.mubr.bf16.mxu0 0
    %278 = vmatmul.mubr.bf16.gmra.mxu0 %v173
    %v279 = vpop.f32.mrf.mxu0
    %v280 = vadd.f32 %v53, %v279
    %v281 = vpop.f32.mrf.mxu0
    %v282 = vadd.f32 %v57, %v281
    %v283 = vpop.f32.mrf.mxu0
    %v284 = vadd.f32 %v53, %v283
    %v285 = vpop.f32.mrf.mxu0
    %v286 = vadd.f32 %v57, %v285
    %287 = vdwg.mxu0
    %288 = vmatprep.subr.bf16.mxu0 0
    %289 = vmatpush1.bf16.msra.mxu0 0
    %290 = vmatprep.subr.bf16.mxu0 0
    %291 = vmatpush1.bf16.msra.mxu0 0
    %292 = vmatprep.subr.bf16.mxu0 0
    %293 = vmatpush1.bf16.msra.mxu0 0
    %294 = vmatprep.subr.bf16.mxu0 0
    %295 = vmatpush1.bf16.msra.mxu0 0
    %296 = vmatprep.subr.bf16.mxu0 0
    %297 = vmatpush1.bf16.msra.mxu0 0
    %298 = vmatprep.subr.bf16.mxu0 0
    %299 = vmatpush1.bf16.msra.mxu0 0
    %300 = vmatprep.subr.bf16.mxu0 %v141
    %301 = vmatpush1.bf16.msra.mxu0 %v140
    %302 = vmatprep.subr.bf16.mxu0 %v137
    %303 = vmatpush1.bf16.msra.mxu0 %v136
    %304 = vmatprep.subr.bf16.mxu0 0
    %305 = vmatpush2.bf16.msra.mxu0 0
    %306 = vmatprep.subr.bf16.mxu0 0
    %307 = vmatpush2.bf16.msra.mxu0 0
    %308 = vmatprep.subr.bf16.mxu0 0
    %309 = vmatpush2.bf16.msra.mxu0 0
    %310 = vmatprep.subr.bf16.mxu0 0
    %311 = vmatpush2.bf16.msra.mxu0 0
    %312 = vmatprep.subr.bf16.mxu0 0
    %313 = vmatpush2.bf16.msra.mxu0 0
    %314 = vmatprep.subr.bf16.mxu0 0
    %315 = vmatpush2.bf16.msra.mxu0 0
    %316 = vmatprep.subr.bf16.mxu0 0
    %317 = vmatpush2.bf16.msra.mxu0 0
    %318 = vmatprep.subr.bf16.mxu0 0
    %319 = vmatpush2.bf16.msra.mxu0 0
    %320 = vmatprep.mubr.bf16.mxu0 0
    %321 = vmatmul.mubr.bf16.gmra.mxu0 %v152
    %v322 = vpop.f32.mrf.mxu0
    %v323 = vadd.f32 %v61, %v322
    %v324 = vpop.f32.mrf.mxu0
    %v325 = vadd.f32 %v65, %v324
    %v326 = vpop.f32.mrf.mxu0
    %v327 = vadd.f32 %v61, %v326
    %v328 = vpop.f32.mrf.mxu0
    %v329 = vadd.f32 %v65, %v328
    %330 = vmatprep.mubr.bf16.mxu0 0
    %331 = vmatmul.mubr.bf16.gmra.mxu0 %v155
    %v332 = vpop.f32.mrf.mxu0
    %v333 = vadd.f32 %v61, %v332
    %v334 = vpop.f32.mrf.mxu0
    %v335 = vadd.f32 %v65, %v334
    %v336 = vpop.f32.mrf.mxu0
    %v337 = vadd.f32 %v61, %v336
    %v338 = vpop.f32.mrf.mxu0
    %v339 = vadd.f32 %v65, %v338
    %340 = vmatprep.mubr.bf16.mxu0 0
    %341 = vmatmul.mubr.bf16.gmra.mxu0 %v158
    %v342 = vpop.f32.mrf.mxu0
    %v343 = vadd.f32 %v61, %v342
    %v344 = vpop.f32.mrf.mxu0
    %v345 = vadd.f32 %v65, %v344
    %v346 = vpop.f32.mrf.mxu0
    %v347 = vadd.f32 %v61, %v346
    %v348 = vpop.f32.mrf.mxu0
    %v349 = vadd.f32 %v65, %v348
    %350 = vmatprep.mubr.bf16.mxu0 0
    %351 = vmatmul.mubr.bf16.gmra.mxu0 %v161
    %v352 = vpop.f32.mrf.mxu0
    %v353 = vadd.f32 %v61, %v352
    %v354 = vpop.f32.mrf.mxu0
    %v355 = vadd.f32 %v65, %v354
    %v356 = vpop.f32.mrf.mxu0
    %v357 = vadd.f32 %v61, %v356
    %v358 = vpop.f32.mrf.mxu0
    %v359 = vadd.f32 %v65, %v358
    %360 = vmatprep.mubr.bf16.mxu0 0
    %361 = vmatmul.mubr.bf16.gmra.mxu0 %v164
    %v362 = vpop.f32.mrf.mxu0
    %v363 = vadd.f32 %v61, %v362
    %v364 = vpop.f32.mrf.mxu0
    %v365 = vadd.f32 %v65, %v364
    %v366 = vpop.f32.mrf.mxu0
    %v367 = vadd.f32 %v61, %v366
    %v368 = vpop.f32.mrf.mxu0
    %v369 = vadd.f32 %v65, %v368
    %370 = vmatprep.mubr.bf16.mxu0 0
    %371 = vmatmul.mubr.bf16.gmra.mxu0 %v167
    %v372 = vpop.f32.mrf.mxu0
    %v373 = vadd.f32 %v61, %v372
    %v374 = vpop.f32.mrf.mxu0
    %v375 = vadd.f32 %v65, %v374
    %v376 = vpop.f32.mrf.mxu0
    %v377 = vadd.f32 %v61, %v376
    %v378 = vpop.f32.mrf.mxu0
    %v379 = vadd.f32 %v65, %v378
    %380 = vmatprep.mubr.bf16.mxu0 0
    %381 = vmatmul.mubr.bf16.gmra.mxu0 %v170
    %v382 = vpop.f32.mrf.mxu0
    %v383 = vadd.f32 %v61, %v382
    %v384 = vpop.f32.mrf.mxu0
    %v385 = vadd.f32 %v65, %v384
    %v386 = vpop.f32.mrf.mxu0
    %v387 = vadd.f32 %v61, %v386
    %v388 = vpop.f32.mrf.mxu0
    %v389 = vadd.f32 %v65, %v388
    %390 = vmatprep.mubr.bf16.mxu0 0
    %391 = vmatmul.mubr.bf16.gmra.mxu0 %v173
    %v392 = vpop.f32.mrf.mxu0
    %v393 = vadd.f32 %v61, %v392
    %v394 = vpop.f32.mrf.mxu0
    %v395 = vadd.f32 %v65, %v394
    %v396 = vpop.f32.mrf.mxu0
    %v397 = vadd.f32 %v61, %v396
    %v398 = vpop.f32.mrf.mxu0
    %v399 = vadd.f32 %v65, %v398
    %400 = vdwg.mxu0
    %v401 = vmax.f32 %v210, 0.0
    %v402 = vmax.f32 %v212, 0.0
    %v403 = vmax.f32 %v323, 0.0
    %v404 = vmax.f32 %v325, 0.0
    %v405 = vmax.f32 %v214, 0.0
    %v406 = vmax.f32 %v216, 0.0
    %v407 = vmax.f32 %v327, 0.0
    %v408 = vmax.f32 %v329, 0.0
    %v409 = vmax.f32 %v220, 0.0
    %v410 = vmax.f32 %v222, 0.0
    %v411 = vmax.f32 %v333, 0.0
    %v412 = vmax.f32 %v335, 0.0
    %v413 = vmax.f32 %v224, 0.0
    %v414 = vmax.f32 %v226, 0.0
    %v415 = vmax.f32 %v337, 0.0
    %v416 = vmax.f32 %v339, 0.0
    %v417 = vmax.f32 %v230, 0.0
    %v418 = vmax.f32 %v232, 0.0
    %v419 = vmax.f32 %v343, 0.0
    %v420 = vmax.f32 %v345, 0.0
    %v421 = vmax.f32 %v234, 0.0
    %v422 = vmax.f32 %v236, 0.0
    %v423 = vmax.f32 %v347, 0.0
    %v424 = vmax.f32 %v349, 0.0
    %v425 = vmax.f32 %v240, 0.0
    %v426 = vmax.f32 %v242, 0.0
    %v427 = vmax.f32 %v353, 0.0
    %v428 = vmax.f32 %v355, 0.0
    %v429 = vmax.f32 %v244, 0.0
    %v430 = vmax.f32 %v246, 0.0
    %v431 = vmax.f32 %v357, 0.0
    %v432 = vmax.f32 %v359, 0.0
    %v433 = vmax.f32 %v250, 0.0
    %v434 = vmax.f32 %v252, 0.0
    %v435 = vmax.f32 %v363, 0.0
    %v436 = vmax.f32 %v365, 0.0
    %v437 = vmax.f32 %v254, 0.0
    %v438 = vmax.f32 %v256, 0.0
    %v439 = vmax.f32 %v367, 0.0
    %v440 = vmax.f32 %v369, 0.0
    %v441 = vmax.f32 %v260, 0.0
    %v442 = vmax.f32 %v262, 0.0
    %v443 = vmax.f32 %v373, 0.0
    %v444 = vmax.f32 %v375, 0.0
    %v445 = vmax.f32 %v264, 0.0
    %v446 = vmax.f32 %v266, 0.0
    %v447 = vmax.f32 %v377, 0.0
    %v448 = vmax.f32 %v379, 0.0
    %v449 = vmax.f32 %v270, 0.0
    %v450 = vmax.f32 %v272, 0.0
    %v451 = vmax.f32 %v383, 0.0
    %v452 = vmax.f32 %v385, 0.0
    %v453 = vmax.f32 %v274, 0.0
    %v454 = vmax.f32 %v276, 0.0
    %v455 = vmax.f32 %v387, 0.0
    %v456 = vmax.f32 %v389, 0.0
    %v457 = vmax.f32 %v280, 0.0
    %v458 = vmax.f32 %v282, 0.0
    %v459 = vmax.f32 %v393, 0.0
    %v460 = vmax.f32 %v395, 0.0
    %v461 = vmax.f32 %v284, 0.0
    %v462 = vmax.f32 %v286, 0.0
    %v463 = vmax.f32 %v397, 0.0
    %v464 = vmax.f32 %v399, 0.0
    %v465 = vld [vmem:[%s3] sm:$0xf]
    %v466 = vld [vmem:[#allocation2] sm:$0x1]
    %468 = vset.pattern.permute.xlu0 0
    %469 = vperm.xlu0 %468, %v466
    %v470 = vpop.permute.xlu0 %469
    %v472 = vlaneseq
    %v473 = vshrl.u32 %v472, 7
    %v474 = vsub.s32 0, %v473
    %v475 = vrot.slane %v470, %v474
    %v477 = vlaneseq
    %v478 = vshrl.u32 %v477, 7
    %v479 = vsub.s32 0, %v478
    %v480 = vrot.slane %v465, %v479
    %v481 = vlaneseq
    %v482 = vshrl.u32 %v481, 7
    %v483 = vsub.s32 1, %v482
    %v484 = vrot.slane %v465, %v483
    %v485 = vlaneseq
    %v486 = vshrl.u32 %v485, 7
    %v487 = vsub.s32 2, %v486
    %v488 = vrot.slane %v465, %v487
    %v489 = vlaneseq
    %v490 = vshrl.u32 %v489, 7
    %v491 = vsub.s32 3, %v490
    %v492 = vrot.slane %v465, %v491
    %497 = vmatprep.subr.mxu0 %v462
    %498 = vmatpush1.xpose.msra.mxu0 %v461
    %499 = vmatprep.subr.mxu0 %v458
    %500 = vmatpush1.xpose.msra.mxu0 %v457
    %501 = vmatprep.subr.mxu0 %v454
    %502 = vmatpush1.xpose.msra.mxu0 %v453
    %503 = vmatprep.subr.mxu0 %v450
    %504 = vmatpush1.xpose.msra.mxu0 %v449
    %505 = vmatprep.subr.mxu0 %v446
    %506 = vmatpush1.xpose.msra.mxu0 %v445
    %507 = vmatprep.subr.mxu0 %v442
    %508 = vmatpush1.xpose.msra.mxu0 %v441
    %509 = vmatprep.subr.mxu0 %v438
    %510 = vmatpush1.xpose.msra.mxu0 %v437
    %511 = vmatprep.subr.mxu0 %v434
    %512 = vmatpush1.xpose.msra.mxu0 %v433
    %513 = vmatprep.subr.mxu0 %v430
    %514 = vmatpush1.xpose.msra.mxu0 %v429
    %515 = vmatprep.subr.mxu0 %v426
    %516 = vmatpush1.xpose.msra.mxu0 %v425
    %517 = vmatprep.subr.mxu0 %v422
    %518 = vmatpush1.xpose.msra.mxu0 %v421
    %519 = vmatprep.subr.mxu0 %v418
    %520 = vmatpush1.xpose.msra.mxu0 %v417
    %521 = vmatprep.subr.mxu0 %v414
    %522 = vmatpush1.xpose.msra.mxu0 %v413
    %523 = vmatprep.subr.mxu0 %v410
    %524 = vmatpush1.xpose.msra.mxu0 %v409
    %525 = vmatprep.subr.mxu0 %v406
    %526 = vmatpush1.xpose.msra.mxu0 %v405
    %527 = vmatprep.subr.mxu0 %v402
    %528 = vmatpush1.xpose.msra.mxu0 %v401
    %529 = vmatprep.subr.mxu0 0.0
    %530 = vmatpush2.xpose.msra.mxu0 0.0
    %531 = vmatprep.subr.mxu0 0.0
    %532 = vmatpush2.xpose.msra.mxu0 0.0
    %533 = vmatprep.subr.mxu0 0.0
    %534 = vmatpush2.xpose.msra.mxu0 0.0
    %535 = vmatprep.subr.mxu0 0.0
    %536 = vmatpush2.xpose.msra.mxu0 0.0
    %537 = vmatprep.subr.mxu0 0.0
    %538 = vmatpush2.xpose.msra.mxu0 0.0
    %539 = vmatprep.subr.mxu0 0.0
    %540 = vmatpush2.xpose.msra.mxu0 0.0
    %541 = vmatprep.subr.mxu0 0.0
    %542 = vmatpush2.xpose.msra.mxu0 0.0
    %543 = vmatprep.subr.mxu0 0.0
    %544 = vmatpush2.xpose.msra.mxu0 0.0
    %545 = vmatprep.subr.mxu0 0.0
    %546 = vmatpush2.xpose.msra.mxu0 0.0
    %547 = vmatprep.subr.mxu0 0.0
    %548 = vmatpush2.xpose.msra.mxu0 0.0
    %549 = vmatprep.subr.mxu0 0.0
    %550 = vmatpush2.xpose.msra.mxu0 0.0
    %551 = vmatprep.subr.mxu0 0.0
    %552 = vmatpush2.xpose.msra.mxu0 0.0
    %553 = vmatprep.subr.mxu0 0.0
    %554 = vmatpush2.xpose.msra.mxu0 0.0
    %555 = vmatprep.subr.mxu0 0.0
    %556 = vmatpush2.xpose.msra.mxu0 0.0
    %557 = vmatprep.subr.mxu0 0.0
    %558 = vmatpush2.xpose.msra.mxu0 0.0
    %559 = vmatprep.subr.mxu0 0.0
    %560 = vmatpush2.xpose.msra.mxu0 0.0
    %561 = vmatprep.mubr.f32.mxu0 %v484
    %562 = vmatmul.mubr.f32.gmra.mxu0 %v480
    %v563 = vpop.f32.mrf.mxu0
    %v564 = vadd.f32 %v475, %v563
    %v565 = vpop.f32.mrf.mxu0
    %566 = vdwg.mxu0
    %567 = vmatprep.subr.mxu0 %v464
    %568 = vmatpush1.xpose.msra.mxu0 %v463
    %569 = vmatprep.subr.mxu0 %v460
    %570 = vmatpush1.xpose.msra.mxu0 %v459
    %571 = vmatprep.subr.mxu0 %v456
    %572 = vmatpush1.xpose.msra.mxu0 %v455
    %573 = vmatprep.subr.mxu0 %v452
    %574 = vmatpush1.xpose.msra.mxu0 %v451
    %575 = vmatprep.subr.mxu0 %v448
    %576 = vmatpush1.xpose.msra.mxu0 %v447
    %577 = vmatprep.subr.mxu0 %v444
    %578 = vmatpush1.xpose.msra.mxu0 %v443
    %579 = vmatprep.subr.mxu0 %v440
    %580 = vmatpush1.xpose.msra.mxu0 %v439
    %581 = vmatprep.subr.mxu0 %v436
    %582 = vmatpush1.xpose.msra.mxu0 %v435
    %583 = vmatprep.subr.mxu0 %v432
    %584 = vmatpush1.xpose.msra.mxu0 %v431
    %585 = vmatprep.subr.mxu0 %v428
    %586 = vmatpush1.xpose.msra.mxu0 %v427
    %587 = vmatprep.subr.mxu0 %v424
    %588 = vmatpush1.xpose.msra.mxu0 %v423
    %589 = vmatprep.subr.mxu0 %v420
    %590 = vmatpush1.xpose.msra.mxu0 %v419
    %591 = vmatprep.subr.mxu0 %v416
    %592 = vmatpush1.xpose.msra.mxu0 %v415
    %593 = vmatprep.subr.mxu0 %v412
    %594 = vmatpush1.xpose.msra.mxu0 %v411
    %595 = vmatprep.subr.mxu0 %v408
    %596 = vmatpush1.xpose.msra.mxu0 %v407
    %597 = vmatprep.subr.mxu0 %v404
    %598 = vmatpush1.xpose.msra.mxu0 %v403
    %599 = vmatprep.subr.mxu0 0.0
    %600 = vmatpush2.xpose.msra.mxu0 0.0
    %601 = vmatprep.subr.mxu0 0.0
    %602 = vmatpush2.xpose.msra.mxu0 0.0
    %603 = vmatprep.subr.mxu0 0.0
    %604 = vmatpush2.xpose.msra.mxu0 0.0
    %605 = vmatprep.subr.mxu0 0.0
    %606 = vmatpush2.xpose.msra.mxu0 0.0
    %607 = vmatprep.subr.mxu0 0.0
    %608 = vmatpush2.xpose.msra.mxu0 0.0
    %609 = vmatprep.subr.mxu0 0.0
    %610 = vmatpush2.xpose.msra.mxu0 0.0
    %611 = vmatprep.subr.mxu0 0.0
    %612 = vmatpush2.xpose.msra.mxu0 0.0
    %613 = vmatprep.subr.mxu0 0.0
    %614 = vmatpush2.xpose.msra.mxu0 0.0
    %615 = vmatprep.subr.mxu0 0.0
    %616 = vmatpush2.xpose.msra.mxu0 0.0
    %617 = vmatprep.subr.mxu0 0.0
    %618 = vmatpush2.xpose.msra.mxu0 0.0
    %619 = vmatprep.subr.mxu0 0.0
    %620 = vmatpush2.xpose.msra.mxu0 0.0
    %621 = vmatprep.subr.mxu0 0.0
    %622 = vmatpush2.xpose.msra.mxu0 0.0
    %623 = vmatprep.subr.mxu0 0.0
    %624 = vmatpush2.xpose.msra.mxu0 0.0
    %625 = vmatprep.subr.mxu0 0.0
    %626 = vmatpush2.xpose.msra.mxu0 0.0
    %627 = vmatprep.subr.mxu0 0.0
    %628 = vmatpush2.xpose.msra.mxu0 0.0
    %629 = vmatprep.subr.mxu0 0.0
    %630 = vmatpush2.xpose.msra.mxu0 0.0
    %631 = vmatprep.mubr.f32.mxu0 %v492
    %632 = vmatmul.mubr.f32.gmra.mxu0 %v488
    %v633 = vpop.f32.mrf.mxu0
    %v634 = vadd.f32 %v564, %v633
    %v635 = vpop.f32.mrf.mxu0
    %636 = vdwg.mxu0
    %637 = vst [vmem:[#allocation3] sm:$0x1] %v634
    // Predicated region
    $region22: #{tpu_custom_call.1} parent=1 // pred_check
      _
    $region23: #{tpu_custom_call.1} parent=1 // pred_check_branch
      %639 = sbr.rel (0) target = $region25
    $region24: #{tpu_custom_call.1} parent=1 // pred_region
      %s641 = ssub.s32 16, 16
      %642 = vsyncadd [#allocation4], %s641
      %s644 = sshll.u32 [#allocation3], 4
      %s645 = int_to_ptr.vmem [resolvable:$true] %s644
      %647 = dma.vmem_to_hbm [thread:$0]  %s645, 16, %s5, [#allocation4]
    $region25: #{tpu_custom_call.1} parent=1 // pred_fallthru
      _
    // Predicated region
    $region26: #{tpu_custom_call.1} parent=1 // pred_check
      _
    $region27: #{tpu_custom_call.1} parent=1 // pred_check_branch
      %649 = sbr.rel (0) target = $region29
    $region28: #{tpu_custom_call.1} parent=1 // pred_region
      %650 = dma.done [#allocation4], 16
    $region29: #{tpu_custom_call.1} parent=1 // pred_fallthru
      _
    %651 = vsyncpa [#allocation4], 1

</llo_original>
